<compile_context>
chip_gen: v5e
topology: v5e:2x2
jax: 0.10.0
libtpu: 0.0.40
codegen_flags: <defaults>
</compile_context>

<pallas_src>
import math

import jax
import jax.numpy as jnp
from jax.experimental import pallas as pl
from jax.experimental.pallas import tpu as pltpu


_LANE = 128
_SUBLANE = 8
_TARGET_BLOCK_BYTES = 2 * 1024 * 1024  # ~2 MiB per block (known-good vs roofline)
_WIDTHS = (8192, 4096, 2048, 1024, 512, 256, 128)  # widest lane-dense last dim


def _make_kernel(f):
    def _kernel(x_ref, o_ref):
        o_ref[...] = f(x_ref[...]).astype(o_ref.dtype)
    return _kernel


def _run_2d(x2d: jax.Array, f, *, donate_input: bool = False) -> jax.Array:
    """Run the per-tile elementwise kernel over a lane-dense (rows, width) slab."""
    rows, width = x2d.shape
    itemsize = jnp.dtype(x2d.dtype).itemsize

    # Row tile targeting ~2 MiB blocks, aligned to the packed sublane group for
    # the dtype (8 rows f32, 16 bf16, 32 int8).  If the tile covers all rows
    # the block equals the full array dims, which is always legal.
    sub = max(_SUBLANE, 32 // itemsize)
    tr = max(sub, (_TARGET_BLOCK_BYTES // (width * itemsize)) // sub * sub)
    tr = min(tr, rows)

    grid = (pl.cdiv(rows, tr),)  # non-dividing final block handled by Pallas

    cost = pl.CostEstimate(
        flops=0,
        transcendentals=0,
        bytes_accessed=2 * rows * width * itemsize,
    )

    return pl.pallas_call(
        _make_kernel(f),
        out_shape=jax.ShapeDtypeStruct((rows, width), x2d.dtype),
        grid_spec=pltpu.PrefetchScalarGridSpec(
            num_scalar_prefetch=0,
            grid=grid,
            in_specs=[pl.BlockSpec((tr, width), lambda i: (i, 0))],
            out_specs=pl.BlockSpec((tr, width), lambda i: (i, 0)),
        ),
        compiler_params=pltpu.CompilerParams(
            dimension_semantics=("parallel",),
        ),
        cost_estimate=cost,
        input_output_aliases=({0: 0} if donate_input else {}),
    )(x2d)


def lambda_forward(x: jax.Array, f=lambda v: v, *, donate_input: bool = False) -> jax.Array:
    """Pallas implementation of Lambda(f).forward(x).

    Supports any shape/dtype-preserving elementwise `f` (default: identity).
    """
    orig_shape = x.shape
    n = int(math.prod(orig_shape)) if orig_shape else 1
    if n == 0:
        return x  # nothing to do for empty tensors
    itemsize = jnp.dtype(x.dtype).itemsize

    # Fast path: view the tensor as a lane-dense 2D slab with no padding and
    # the widest last dim (better DMA descriptors / unmasked vst).
    width = next((w for w in _WIDTHS if n % w == 0), None)
    if width is not None:
        x2d = x.reshape(n // width, width)
        out2d = _run_2d(x2d, f, donate_input=donate_input)
        return out2d.reshape(orig_shape)

    # Rare fallback: numel not a multiple of 128 -> pad flat buffer, run, strip.
    sub = max(_SUBLANE, 32 // itemsize)
    rows = -(-n // _LANE)
    rows_padded = -(-rows // sub) * sub
    pad = rows_padded * _LANE - n
    flat = x.reshape(-1)
    if pad:
        flat = jnp.pad(flat, (0, pad))
    x2d = flat.reshape(rows_padded, _LANE)
    out2d = _run_2d(x2d, f, donate_input=False)
    return out2d.reshape(-1)[:n].reshape(orig_shape)


if __name__ == "__main__":
    key = jax.random.PRNGKey(0)
    # Small NCHW input consistent with a conv-net pass-through.
    x = jax.random.normal(key, (2, 4, 16, 16), dtype=jnp.float32)

    # Lambda(lambda v: v) — identity (fast, no-pad path; single lane-dense block).
    y = lambda_forward(x)
    y = jax.block_until_ready(y)
    assert y.shape == x.shape, (y.shape, x.shape)
    assert y.dtype == x.dtype, (y.dtype, x.dtype)
    assert bool(jnp.array_equal(y, x)), "identity Lambda output mismatch"

    # Lambda(lambda v: 2*v) — non-trivial elementwise f through the same kernel.
    y2 = jax.block_until_ready(lambda_forward(x, lambda v: v * 2.0))
    assert bool(jnp.array_equal(y2, x * 2.0)), "scaled Lambda output mismatch"

    # Shape whose numel is not a multiple of 128 — exercises the padded fallback.
    x_odd = jax.random.normal(jax.random.PRNGKey(1), (3, 5, 7), dtype=jnp.float32)
    y3 = jax.block_until_ready(lambda_forward(x_odd))
    assert bool(jnp.array_equal(y3, x_odd)), "padded-path Lambda output mismatch"

    # bf16 input — exercises the dtype-scaled sublane-group row tiling.
    x_bf16 = jax.random.normal(jax.random.PRNGKey(2), (2, 8, 32), dtype=jnp.bfloat16)
    y4 = jax.block_until_ready(lambda_forward(x_bf16))
    assert bool(jnp.array_equal(y4, x_bf16)), "bf16 Lambda output mismatch"

    print("KERNEL_OK")
</pallas_src>

<mosaic_0001>
module attributes {stable_mosaic.version = 11 : i64} {
  func.func @_kernel(%arg0: i32, %arg1: memref<1x2048xf32, #tpu.memory_space<vmem>>, %arg2: memref<1x2048xf32, #tpu.memory_space<vmem>>) attributes {dimension_semantics = [#tpu.dimension_semantics<parallel>], iteration_bounds = array<i64: 1>, scalar_prefetch = 0 : i64, scratch_operands = 0 : i64, tpu.core_type = #tpu.core_type<tc>, window_params = [{transform_indices = @transform_0, window_bounds = array<i64: 1, 2048>}, {transform_indices = @transform_1, window_bounds = array<i64: 1, 2048>}]} {
    %c0 = arith.constant 0 : index
    %c0_0 = arith.constant 0 : index
    %0 = vector.load %arg1[%c0, %c0_0] : memref<1x2048xf32, #tpu.memory_space<vmem>>, vector<1x2048xf32>
    %c0_1 = arith.constant 0 : index
    %c0_2 = arith.constant 0 : index
    %1 = vector.load %arg2[%c0_1, %c0_2] : memref<1x2048xf32, #tpu.memory_space<vmem>>, vector<1x2048xf32>
    tpu.vector_store %arg2[%c0_1, %c0_2], %0 {strides = array<i32>} : memref<1x2048xf32, #tpu.memory_space<vmem>>, vector<1x2048xf32>,
    return
  }
  func.func @transform_0(%arg0: i32) -> (i32, i32) {
    %c0_i32 = arith.constant 0 : i32
    %c0_i32_0 = arith.constant 0 : i32
    return %arg0, %c0_i32 : i32, i32
  }
  func.func @transform_1(%arg0: i32) -> (i32, i32) {
    %c0_i32 = arith.constant 0 : i32
    %c0_i32_0 = arith.constant 0 : i32
    return %arg0, %c0_i32 : i32, i32
  }
}

</mosaic_0001>

<llo_original>
// kernel: tpu_custom_call.1
$region0: #{tpu_custom_call.1}
  #allocation0 [shape = 'u32[]', space=smem, size = 0x4, offset = 0x4, fixed_abs, tag = 'smem constant byte address 0x4 - core index']
  #allocation1 [shape = 'u32[72,128]{1,0:T(1,128)}', space=vmem, size = 0x9000, scoped, tag = 'internal scratch']
  %s0 = inlined_call_operand.hbm [shape: f32[1,2048], index: 0, kind: input, shape index: {}]
  %s1 = inlined_call_operand.hbm [shape: f32[1,2048], index: 1, kind: output, shape index: {}]
  %s2 = sld [smem:[#allocation0]]
  $region18: #{tpu_custom_call.1} parent=0
    _
  %s4 = ssub.s32 1, %s2
  %s5 = scalar_select 0, %s4, %s2
  $region1: #{tpu_custom_call.1} parent=0
    #allocation2 [shape = 'u8[8192]{0}', space=vmem, size = 0x2000, scoped, tag = 'input window, operand 0, single buffered']
    #allocation3 [shape = 's32[1]{0}', space=sflag, size = 0x4, scoped, tag = 'scoped memory for tpu_custom_call.1']
    #allocation4 [shape = 's32[1]{0}', space=sflag, size = 0x4, scoped, tag = 'scoped memory for tpu_custom_call.1']
    #allocation5 [shape = 'u8[8192]{0}', space=vmem, size = 0x2000, scoped, tag = 'output window, operand 0, single buffered']
    %6 = vsyncpa [#allocation3], 0
    %7 = vsyncpa [#allocation4], 0
    // Predicated region
    $region2: #{tpu_custom_call.1} parent=1 // pred_check
      _
    $region3: #{tpu_custom_call.1} parent=1 // pred_check_branch
      %9 = sbr.rel (0) target = $region5
    $region4: #{tpu_custom_call.1} parent=1 // pred_region
      %11 = vsyncadd [#allocation3], 0
      %s13 = sshll.u32 %s0, 4
      %s14 = int_to_ptr.hbm [resolvable:$true] %s13
      %s15 = sshll.u32 [#allocation2], 4
      %s16 = int_to_ptr.vmem [resolvable:$true] %s15
      %18 = dma.hbm_to_vmem [thread:$0]  %s14, 256, %s16, [#allocation3]
    $region5: #{tpu_custom_call.1} parent=1 // pred_fallthru
      _
    // Predicated region
    $region6: #{tpu_custom_call.1} parent=1 // pred_check
      _
    $region7: #{tpu_custom_call.1} parent=1 // pred_check_branch
      %20 = sbr.rel (0) target = $region9
    $region8: #{tpu_custom_call.1} parent=1 // pred_region
      %22 = dma.done [#allocation3], 256
    $region9: #{tpu_custom_call.1} parent=1 // pred_fallthru
      _
    %v23 = vld [vmem:[#allocation2] sm:$0xff]
    %v24 = vld [vmem:[#allocation2 + $0x8] sm:$0xff]
    %25 = vst [vmem:[#allocation5] sm:$0xff] %v23
    %26 = vst [vmem:[#allocation5 + $0x8] sm:$0xff] %v24
    // Predicated region
    $region10: #{tpu_custom_call.1} parent=1 // pred_check
      _
    $region11: #{tpu_custom_call.1} parent=1 // pred_check_branch
      %28 = sbr.rel (0) target = $region13
    $region12: #{tpu_custom_call.1} parent=1 // pred_region
      %30 = vsyncadd [#allocation4], 0
      %s32 = sshll.u32 [#allocation5], 4
      %s33 = int_to_ptr.vmem [resolvable:$true] %s32
      %s34 = sshll.u32 %s1, 4
      %s35 = int_to_ptr.hbm [resolvable:$true] %s34
      %37 = dma.vmem_to_hbm [thread:$0]  %s33, 256, %s35, [#allocation4]
    $region13: #{tpu_custom_call.1} parent=1 // pred_fallthru
      _
    // Predicated region
    $region14: #{tpu_custom_call.1} parent=1 // pred_check
      _
    $region15: #{tpu_custom_call.1} parent=1 // pred_check_branch
      %39 = sbr.rel (0) target = $region17
    $region16: #{tpu_custom_call.1} parent=1 // pred_region
      %41 = dma.done [#allocation4], 256
    $region17: #{tpu_custom_call.1} parent=1 // pred_fallthru
      _
    %42 = vsyncpa [#allocation3], 1
    %43 = vsyncpa [#allocation4], 1

</llo_original>
